<compile_context>
chip_gen: v6e
topology: v6e:2x2x1
jax: 0.10.0
libtpu: 0.0.40
codegen_flags: <defaults>
</compile_context>

<pallas_src>
import jax
import jax.numpy as jnp
from jax.experimental import pallas as pl
from jax.experimental.pallas import tpu as pltpu


def _round_up(x: int, m: int) -> int:
    return (x + m - 1) // m * m


def _cdiv(a: int, b: int) -> int:
    return (a + b - 1) // b


def _vmem_budget():
    """Generation-aware VMEM sizing: (tile budget bytes, compiler vmem_limit_bytes)."""
    cap = 64 << 20  # conservative fallback (v7x physical VMEM per TC)
    try:
        cap = int(pltpu.get_tpu_info().vmem_capacity_bytes)
    except Exception:
        pass
    cap = max(32 << 20, min(cap, 128 << 20))
    limit = min(cap * 3 // 4, 100 << 20)     # v5e/v6e -> ~96-100 MiB, v7x -> ~48 MiB
    budget = max(16 << 20, limit - (8 << 20))  # headroom for Mosaic-internal scratch
    return budget, limit


def _choose_tiles(m: int, ckk: int, ocp: int, budget_bytes: int):
    """Pick (TILE_M, TILE_K, CKK_pad, num_k) fitting the double-buffered VMEM budget."""
    # K tile: multiple of 128; split CKK into roughly equal <=1024-wide chunks.
    ckk_128 = _round_up(ckk, 128)
    num_k = _cdiv(ckk_128, 1024)
    tile_k = _round_up(_cdiv(ckk_128, num_k), 128)
    ckk_pad = tile_k * num_k

    # M tile: largest power of two whose pipelined footprint fits the budget.
    tile_m = 2048
    while tile_m > 8:
        p1 = (2 * (tile_m * tile_k * 2        # patches tile (bf16, 2 buffers)
                   + tile_k * ocp * 2         # weight tile  (bf16, 2 buffers)
                   + tile_m * ocp * 2         # y out        (bf16, 2 buffers)
                   + 8 * ocp * 4)             # stats out    (f32, 2 buffers)
              + tile_m * ocp * 4)             # f32 accumulator scratch (1 buffer)
        p2 = 2 * (tile_m * ocp * 2            # y in (bf16)
                  + tile_m * ocp * 4          # out (f32)
                  + 2 * ocp * 4)              # scale/shift
        if max(p1, p2) <= budget_bytes:
            break
        tile_m //= 2
    tile_m = max(8, tile_m)
    # TODO(synk): mark the weight / scale / shift specs pipeline_mode=pl.Buffered(1)
    # (constant index_map) and reclaim that buffer from the budget above.

    # Guarantee >= 2 M tiles when possible so v7x's 2 TensorCores both get work.
    if m > 8:
        tile_m = min(tile_m, _round_up((m + 1) // 2, 8))
    return tile_m, tile_k, ckk_pad, num_k


# ---- Pass 1: conv-as-matmul on the MXU (K-tiled, f32 accum) + BN partial stats ----
def _matmul_stats_kernel(p_ref, w_ref, y_ref, stats_ref, acc_ref):
    # p_ref: (TILE_M, TILE_K) bf16, w_ref: (TILE_K, OCp) bf16
    # y_ref: (TILE_M, OCp) bf16, stats_ref: (8, OCp) f32, acc_ref: (TILE_M, OCp) f32
    k = pl.program_id(1)

    @pl.when(k == 0)
    def _():
        acc_ref[...] = jnp.zeros_like(acc_ref)

    acc_ref[...] += jnp.dot(p_ref[...], w_ref[...],
                            preferred_element_type=jnp.float32)

    @pl.when(k == pl.num_programs(1) - 1)
    def _():
        y = acc_ref[...]                              # full-precision f32 accumulator
        y_ref[...] = y.astype(y_ref.dtype)            # bf16 writeback (halves HBM bytes)
        # Rows 2..7 of the (8, OCp) stats block exist only to satisfy the sublane tile
        # and are never read downstream; leave them unwritten.
        stats_ref[0:1, :] = jnp.sum(y, axis=0, keepdims=True)
        stats_ref[1:2, :] = jnp.sum(y * y, axis=0, keepdims=True)


# ---- Pass 2: normalize + affine + ReLU ----
def _bn_relu_kernel(y_ref, scale_ref, shift_ref, o_ref):
    o_ref[...] = jnp.maximum(
        y_ref[...].astype(jnp.float32) * scale_ref[...] + shift_ref[...], 0.0)


def basic_conv_pallas(x, weight, gamma, beta, *, stride=1, padding=0, eps=1e-5,
                      out_format="NCHW"):
    """x: (N, C, H, W); weight: (OC, C, KH, KW); gamma, beta: (OC,).

    Returns ReLU(BatchNorm2d(Conv2d(x, weight, bias=None), training batch stats)) as
    f32, in NCHW (PyTorch default) or NHWC (out_format="NHWC", avoids the final
    transpose and keeps OC on the lane dimension).
    """
    N, C, H, W = x.shape
    OC, _, KH, KW = weight.shape
    OH = (H + 2 * padding - KH) // stride + 1
    OW = (W + 2 * padding - KW) // stride + 1
    M = N * OH * OW
    CKK = C * KH * KW

    # OC is padded to a multiple of 128 for lane-dense MXU columns and unmasked stores.
    # NOTE: for OC << 128 (e.g. OC=8 -> OCp=128) this pays up to 128/OC x padding bytes
    # on y / out (the most expensive tensors); fine for toy shapes.
    # TODO(synk): lane-pack several output columns (or a full-dim OC block) for small OC.
    OCp = _round_up(OC, 128)

    budget, vmem_limit = _vmem_budget()
    TILE_M, TILE_K, CKKp, num_k = _choose_tiles(M, CKK, OCp, budget)
    M_pad = _round_up(M, TILE_M)
    num_m = M_pad // TILE_M

    # ---- im2col glue (plain JAX) ----
    # TODO(synk): gather the (kh, kw) window slices inside pass 1 (halo'd row blocks /
    # manual DMA) to remove the KH*KW im2col HBM blowup; allow_input_fusion does not
    # reliably fuse the pad/stack/transpose chain, so `patches` materializes in HBM.
    xp = jnp.pad(x, ((0, 0), (0, 0), (padding, padding), (padding, padding)))
    cols = []
    for kh in range(KH):
        for kw in range(KW):
            cols.append(xp[:, :, kh:kh + OH * stride:stride, kw:kw + OW * stride:stride])
    patches = jnp.stack(cols, axis=2)                         # (N, C, KH*KW, OH, OW)
    patches = patches.transpose(0, 3, 4, 1, 2).reshape(M, CKK)
    patches = patches.astype(jnp.bfloat16)                    # bf16 feeds the MXU
    patches = jnp.pad(patches, ((0, M_pad - M), (0, CKKp - CKK)))

    w_mat = weight.reshape(OC, CKK).T.astype(jnp.bfloat16)    # (CKK, OC), same ordering
    w_mat = jnp.pad(w_mat, ((0, CKKp - CKK), (0, OCp - OC)))

    # ---- Pass 1: K-tiled matmul + partial stats (M tiles parallel, K arbitrary) ----
    cost1 = pl.CostEstimate(
        flops=2 * M_pad * CKKp * OCp,
        transcendentals=0,
        bytes_accessed=M_pad * CKKp * 2 + num_m * CKKp * OCp * 2
        + M_pad * OCp * 2 + num_m * 8 * OCp * 4,
    )
    y_flat, stats = pl.pallas_call(
        _matmul_stats_kernel,
        out_shape=(
            jax.ShapeDtypeStruct((M_pad, OCp), jnp.bfloat16),   # bf16 y round-trip
            jax.ShapeDtypeStruct((num_m * 8, OCp), jnp.float32),
        ),
        grid=(num_m, num_k),
        in_specs=[
            pl.BlockSpec((TILE_M, TILE_K), lambda i, k: (i, k)),
            pl.BlockSpec((TILE_K, OCp), lambda i, k: (k, 0)),
        ],
        out_specs=(
            pl.BlockSpec((TILE_M, OCp), lambda i, k: (i, 0)),
            pl.BlockSpec((8, OCp), lambda i, k: (i, 0)),
        ),
        scratch_shapes=[pltpu.VMEM((TILE_M, OCp), jnp.float32)],
        compiler_params=pltpu.CompilerParams(
            dimension_semantics=("parallel", "arbitrary"),
            vmem_limit_bytes=vmem_limit,
            allow_input_fusion=[True, True],
        ),
        cost_estimate=cost1,
    )(patches, w_mat)

    # ---- Batch statistics over the FULL M (zero-padded rows contribute nothing) ----
    stats = stats.reshape(num_m, 8, OCp)
    total = jnp.sum(stats[:, 0, :], axis=0)                   # (OCp,) sum
    total_sq = jnp.sum(stats[:, 1, :], axis=0)                # (OCp,) sum of squares
    m = jnp.float32(M)                                        # true element count
    mean = total / m
    # NOTE: single-pass E[y^2] - mean^2 in f32 (PyTorch biased forward variance). Fine
    # at these magnitudes/counts; can lose precision when |mean| >> std over huge M.
    # TODO(synk): per-tile centered sums / Welford combine if used with very large M.
    var = jnp.maximum(total_sq / m - mean * mean, 0.0)
    inv_std = jax.lax.rsqrt(var + eps)

    gamma_p = jnp.pad(gamma.astype(jnp.float32), (0, OCp - OC))
    beta_p = jnp.pad(beta.astype(jnp.float32), (0, OCp - OC))
    scale = (gamma_p * inv_std).reshape(1, OCp)
    shift = (beta_p - mean * gamma_p * inv_std).reshape(1, OCp)

    # ---- Pass 2: normalize + affine + ReLU (parallel over M tiles) ----
    cost2 = pl.CostEstimate(
        flops=3 * M_pad * OCp,
        transcendentals=0,
        bytes_accessed=M_pad * OCp * 2 + M_pad * OCp * 4 + 2 * OCp * 4,
    )
    # TODO(synk): emit the output in bf16 and alias onto y_flat via
    # input_output_aliases={0: 0} to drop the extra (M_pad, OCp) HBM allocation.
    out_flat = pl.pallas_call(
        _bn_relu_kernel,
        out_shape=jax.ShapeDtypeStruct((M_pad, OCp), jnp.float32),
        grid=(num_m,),
        in_specs=[
            pl.BlockSpec((TILE_M, OCp), lambda i: (i, 0)),
            pl.BlockSpec((1, OCp), lambda i: (0, 0)),
            pl.BlockSpec((1, OCp), lambda i: (0, 0)),
        ],
        out_specs=pl.BlockSpec((TILE_M, OCp), lambda i: (i, 0)),
        compiler_params=pltpu.CompilerParams(
            dimension_semantics=("parallel",),
            vmem_limit_bytes=vmem_limit,
        ),
        cost_estimate=cost2,
    )(y_flat, scale, shift)

    # Drop row/lane padding; (M, OC) -> NHWC (lane-dense OC).
    out = out_flat[:M, :OC].reshape(N, OH, OW, OC)
    if out_format == "NHWC":
        return out
    return out.transpose(0, 3, 1, 2)                          # PyTorch NCHW convention


def _reference(x, weight, gamma, beta, *, stride=1, padding=0, eps=1e-5):
    y = jax.lax.conv_general_dilated(
        x, weight,
        window_strides=(stride, stride),
        padding=((padding, padding), (padding, padding)),
        dimension_numbers=("NCHW", "OIHW", "NCHW"),
    )
    mean = jnp.mean(y, axis=(0, 2, 3), keepdims=True)
    var = jnp.mean((y - mean) ** 2, axis=(0, 2, 3), keepdims=True)
    y = (y - mean) * jax.lax.rsqrt(var + eps)
    y = y * gamma.reshape(1, -1, 1, 1) + beta.reshape(1, -1, 1, 1)
    return jnp.maximum(y, 0.0)


if __name__ == "__main__":
    key = jax.random.PRNGKey(0)
    k_x, k_w = jax.random.split(key)

    # BasicConv(in_planes=4, out_planes=8, kernel_size=3, stride=1, padding=1)
    N, C, H, W = 2, 4, 16, 16
    OC, KH, KW = 8, 3, 3
    stride, padding = 1, 1

    x = jax.random.normal(k_x, (N, C, H, W), dtype=jnp.float32)
    weight = jax.random.normal(k_w, (OC, C, KH, KW), dtype=jnp.float32) * 0.1
    gamma = jnp.ones((OC,), dtype=jnp.float32)   # BatchNorm2d default affine init
    beta = jnp.zeros((OC,), dtype=jnp.float32)

    out = basic_conv_pallas(x, weight, gamma, beta, stride=stride, padding=padding)
    out = jax.block_until_ready(out)

    ref = _reference(x, weight, gamma, beta, stride=stride, padding=padding)
    assert out.shape == (N, OC, H, W)
    # bf16 MXU inputs + bf16 y round-trip (intentional) -> bf16-appropriate tolerance.
    assert jnp.max(jnp.abs(out - ref)) < 5e-2, "mismatch vs reference"

    print("KERNEL_OK")
</pallas_src>

<mosaic_0001>
module attributes {stable_mosaic.version = 11 : i64} {
  func.func @_matmul_stats_kernel(%arg0: i32, %arg1: i32, %arg2: memref<256x128xbf16, #tpu.memory_space<vmem>>, %arg3: memref<128x128xbf16, #tpu.memory_space<vmem>>, %arg4: memref<256x128xbf16, #tpu.memory_space<vmem>>, %arg5: memref<8x128xf32, #tpu.memory_space<vmem>>, %arg6: memref<256x128xf32, #tpu.memory_space<vmem>>) attributes {dimension_semantics = [#tpu.dimension_semantics<parallel>, #tpu.dimension_semantics<arbitrary>], iteration_bounds = array<i64: 2, 1>, scalar_prefetch = 0 : i64, scratch_operands = 1 : i64, tpu.core_type = #tpu.core_type<tc>, window_params = [{transform_indices = @transform_0, window_bounds = array<i64: 256, 128>}, {transform_indices = @transform_1, window_bounds = array<i64: 128, 128>}, {transform_indices = @transform_2, window_bounds = array<i64: 256, 128>}, {transform_indices = @transform_3, window_bounds = array<i64: 8, 128>}]} {
    %c0_i32 = arith.constant 0 : i32
    %0 = arith.cmpi eq, %arg1, %c0_i32 : i32
    %1 = arith.extui %0 : i1 to i32
    %c0_i32_0 = arith.constant 0 : i32
    %2 = arith.cmpi ne, %1, %c0_i32_0 : i32
    scf.if %2 {
      %cst_10 = arith.constant 0.000000e+00 : f32
      %12 = vector.broadcast %cst_10 : f32 to vector<256x128xf32>
      %c0_11 = arith.constant 0 : index
      %c0_12 = arith.constant 0 : index
      %13 = vector.load %arg6[%c0_11, %c0_12] : memref<256x128xf32, #tpu.memory_space<vmem>>, vector<256x128xf32>
      tpu.vector_store %arg6[%c0_11, %c0_12], %12 {strides = array<i32>} : memref<256x128xf32, #tpu.memory_space<vmem>>, vector<256x128xf32>,
    } else {
    }
    %c0 = arith.constant 0 : index
    %c0_1 = arith.constant 0 : index
    %3 = vector.load %arg6[%c0, %c0_1] : memref<256x128xf32, #tpu.memory_space<vmem>>, vector<256x128xf32>
    %c0_2 = arith.constant 0 : index
    %c0_3 = arith.constant 0 : index
    %4 = vector.load %arg2[%c0_2, %c0_3] : memref<256x128xbf16, #tpu.memory_space<vmem>>, vector<256x128xbf16>
    %c0_4 = arith.constant 0 : index
    %c0_5 = arith.constant 0 : index
    %5 = vector.load %arg3[%c0_4, %c0_5] : memref<128x128xbf16, #tpu.memory_space<vmem>>, vector<128x128xbf16>
    %cst = arith.constant dense<0.000000e+00> : vector<256x128xf32>
    %6 = tpu.matmul %4, %5, %cst {dimension_numbers = #tpu.dot_dimension_numbers<[1], [0], [0], [1], [0, 0, 1, 1], [], []>} : vector<256x128xbf16>, vector<128x128xbf16>, vector<256x128xf32> -> vector<256x128xf32>
    %7 = arith.addf %3, %6 : vector<256x128xf32>
    %c0_6 = arith.constant 0 : index
    %c0_7 = arith.constant 0 : index
    %8 = vector.load %arg6[%c0_6, %c0_7] : memref<256x128xf32, #tpu.memory_space<vmem>>, vector<256x128xf32>
    tpu.vector_store %arg6[%c0_6, %c0_7], %7 {strides = array<i32>} : memref<256x128xf32, #tpu.memory_space<vmem>>, vector<256x128xf32>,
    %c0_i32_8 = arith.constant 0 : i32
    %9 = arith.cmpi eq, %arg1, %c0_i32_8 : i32
    %10 = arith.extui %9 : i1 to i32
    %c0_i32_9 = arith.constant 0 : i32
    %11 = arith.cmpi ne, %10, %c0_i32_9 : i32
    scf.if %11 {
      %c0_10 = arith.constant 0 : index
      %c0_11 = arith.constant 0 : index
      %12 = vector.load %arg6[%c0_10, %c0_11] : memref<256x128xf32, #tpu.memory_space<vmem>>, vector<256x128xf32>
      %13 = arith.truncf %12 : vector<256x128xf32> to vector<256x128xbf16>
      %c0_12 = arith.constant 0 : index
      %c0_13 = arith.constant 0 : index
      %14 = vector.load %arg4[%c0_12, %c0_13] : memref<256x128xbf16, #tpu.memory_space<vmem>>, vector<256x128xbf16>
      tpu.vector_store %arg4[%c0_12, %c0_13], %13 {strides = array<i32>} : memref<256x128xbf16, #tpu.memory_space<vmem>>, vector<256x128xbf16>,
      %cst_14 = arith.constant dense<0.000000e+00> : vector<128xf32>
      %15 = vector.multi_reduction <add>, %12, %cst_14 [0] : vector<256x128xf32> to vector<128xf32>
      %16 = vector.shape_cast %15 : vector<128xf32> to vector<1x128xf32>
      %c0_15 = arith.constant 0 : index
      %c0_16 = arith.constant 0 : index
      %17 = vector.load %arg5[%c0_15, %c0_16] : memref<8x128xf32, #tpu.memory_space<vmem>>, vector<1x128xf32>
      tpu.vector_store %arg5[%c0_15, %c0_16], %16 {strides = array<i32>} : memref<8x128xf32, #tpu.memory_space<vmem>>, vector<1x128xf32>,
      %18 = arith.mulf %12, %12 : vector<256x128xf32>
      %cst_17 = arith.constant dense<0.000000e+00> : vector<128xf32>
      %19 = vector.multi_reduction <add>, %18, %cst_17 [0] : vector<256x128xf32> to vector<128xf32>
      %20 = vector.shape_cast %19 : vector<128xf32> to vector<1x128xf32>
      %c1 = arith.constant 1 : index
      %c0_18 = arith.constant 0 : index
      %21 = vector.load %arg5[%c1, %c0_18] : memref<8x128xf32, #tpu.memory_space<vmem>>, vector<1x128xf32>
      tpu.vector_store %arg5[%c1, %c0_18], %20 {strides = array<i32>} : memref<8x128xf32, #tpu.memory_space<vmem>>, vector<1x128xf32>,
    } else {
    }
    return
  }
  func.func @transform_0(%arg0: i32, %arg1: i32) -> (i32, i32) {
    %c0_i32 = arith.constant 0 : i32
    return %arg0, %arg1 : i32, i32
  }
  func.func @transform_1(%arg0: i32, %arg1: i32) -> (i32, i32) {
    %c0_i32 = arith.constant 0 : i32
    %c0_i32_0 = arith.constant 0 : i32
    return %arg1, %c0_i32 : i32, i32
  }
  func.func @transform_2(%arg0: i32, %arg1: i32) -> (i32, i32) {
    %c0_i32 = arith.constant 0 : i32
    %c0_i32_0 = arith.constant 0 : i32
    return %arg0, %c0_i32 : i32, i32
  }
  func.func @transform_3(%arg0: i32, %arg1: i32) -> (i32, i32) {
    %c0_i32 = arith.constant 0 : i32
    %c0_i32_0 = arith.constant 0 : i32
    return %arg0, %c0_i32 : i32, i32
  }
}

</mosaic_0001>

<llo_original>
// kernel: tpu_custom_call.1
$region0: #{tpu_custom_call.1}
  #allocation0 [shape = 'u32[]', space=smem, size = 0x4, offset = 0x4, fixed_abs, tag = 'smem constant byte address 0x4 - core index']
  #allocation1 [shape = 'u32[144,128]{1,0:T(1,128)}', space=vmem, size = 0x12000, scoped, tag = 'internal scratch']
  #allocation2 [shape = 'f32[256,128]{1,0:T(8,128)}', space=vmem, size = 0x20000, scoped, tag = 'scratch operand']
  %s0 = inlined_call_operand.hbm [shape: bf16[512,128], index: 0, kind: input, shape index: {}]
  %s1 = inlined_call_operand.hbm [shape: bf16[128,128], index: 1, kind: input, shape index: {}]
  %s2 = inlined_call_operand.hbm [shape: bf16[512,128], index: 2, kind: output, shape index: {0}]
  %s3 = inlined_call_operand.hbm [shape: f32[16,128], index: 3, kind: output, shape index: {1}]
  %4 = xla_tuple %s2, %s3
  %s5 = sld [smem:[#allocation0]]
  $region65: #{tpu_custom_call.1} parent=0
    _
  %s7 = ssub.s32 1, %s5
  %s8 = scalar_select 0, %s7, %s5
  $region1: #{tpu_custom_call.1} parent=0
    #allocation3 [shape = 'u8[131072]{0}', space=vmem, size = 0x20000, scoped, tag = 'input window, operand 0']
    #allocation4 [shape = 's32[2]{0}', space=sflag, size = 0x8, scoped, tag = 'scoped memory for tpu_custom_call.1']
    #allocation5 [shape = 's32[2]{0}', space=sflag, size = 0x8, scoped, tag = 'scoped memory for tpu_custom_call.1']
    #allocation6 [shape = 'u8[32768]{0}', space=vmem, size = 0x8000, scoped, tag = 'input window, operand 1, single buffered']
    #allocation7 [shape = 's32[1]{0}', space=sflag, size = 0x4, scoped, tag = 'scoped memory for tpu_custom_call.1']
    #allocation8 [shape = 'u8[131072]{0}', space=vmem, size = 0x20000, scoped, tag = 'output window, operand 0']
    #allocation9 [shape = 'u8[8192]{0}', space=vmem, size = 0x2000, scoped, tag = 'output window, operand 1']
    #allocation10 [shape = 's32[2]{0}', space=sflag, size = 0x8, scoped, tag = 'scoped memory for tpu_custom_call.1']
    %9 = vsyncpa [#allocation4], 0
    %s10 = scalar_lea.sflag [#allocation4], 1
    %11 = vsyncpa %s10, 0
    %12 = vsyncpa [#allocation7], 0
    %13 = vsyncpa [#allocation5], 0
    %s14 = scalar_lea.sflag [#allocation5], 1
    %15 = vsyncpa %s14, 0
    %16 = vsyncpa [#allocation10], 0
    %s17 = scalar_lea.sflag [#allocation10], 1
    %18 = vsyncpa %s17, 0
    loop: start=0, step=1, limit=4
    $region2: #{tpu_custom_call.1} parent=1 // loop_pre_header
      _
    $region3: #{tpu_custom_call.1} parent=1 // loop_header
      %s20 = sphi 0, %s24
      %p21 = scmp.ge.s32.totalorder %s20, 4
      %s27 = sphi 0, %s39
      %s28 = sphi 0, %s35
      %s29 = sphi 0, %s27
      %s30 = sphi 0, %s28
      %s31 = sphi 0, %s29
      %s32 = sphi 0, %s30
      %s44 = sphi 0, %s46
      %s47 = sphi 0, %s44
      %s48 = sphi 0, %s47
      %s64 = sphi 0, %s48
      %s70 = sphi 0, %s72
      %s73 = sphi 0, %s70
      %s74 = sphi 0, %s73
      %s90 = sphi 0, %s74
      %s96 = sphi 0, %s98
      %s99 = sphi 0, %s96
      %s100 = sphi 0, %s99
      %s116 = sphi 0, %s100
      %s122 = sphi 0, %s124
      %s125 = sphi 0, %s122
      %s126 = sphi 0, %s125
      %s142 = sphi 0, %s126
    $region4: #{tpu_custom_call.1} parent=1 // loop_header_branch
      %23 = sbr.rel (%p21) target = $region8
    $region5: #{tpu_custom_call.1} parent=1 // loop_body
      %s25 = ssub.s32 %s20, 1
      %s26 = ssub.s32 %s20, 2
      %s33 = sadd.s32 1, %s28
      %p34 = scmp.ge.s32.totalorder %s33, 1
      %s35 = scalar_select %p34, 0, %s33
      %s36 = sadd.s32 1, %s27
      %s37 = scalar_select %p34, %s36, %s27
      %p38 = scmp.ge.s32.totalorder %s37, 2
      %s39 = scalar_select %p38, 0, %s37
      %s40 = ssub.s32 %s27, %s39
      %s41 = ssub.s32 %s28, %s35
      %s42 = sor.u32 %s40, %s41
      %p43 = scmp.eq.s32.totalorder %s42, 0
      %s45 = sadd.s32 %s44, 1
      %s46 = scalar_select %p43, %s44, %s45
      %p49 = pneg %p43
      %p50 = scmp.eq.s32.totalorder %s20, 1
      %p51 = por %p49, %p50
      %p52 = scmp.ne.s32.totalorder %s44, %s47
      %p53 = scmp.eq.s32.totalorder %s20, 0
      %p54 = por %p52, %p53
      %p55 = scmp.ne.s32.totalorder %s44, %s47
      %p56 = scmp.eq.s32.totalorder %s25, 1
      %p57 = por %p55, %p56
      %p58 = scmp.ne.s32.totalorder %s47, %s48
      %p59 = scmp.eq.s32.totalorder %s25, 0
      %p60 = por %p58, %p59
      %p61 = scmp.ne.s32.totalorder %s47, %s48
      %p62 = scmp.eq.s32.totalorder %s26, 1
      %p63 = por %p61, %p62
      %p65 = scmp.ne.s32.totalorder %s48, %s64
      %p66 = scmp.eq.s32.totalorder %s26, 0
      %p67 = por %p65, %p66
      %s68 = ssub.s32 %s28, %s35
      %p69 = scmp.eq.s32.totalorder %s68, 0
      %s71 = sadd.s32 %s70, 1
      %s72 = scalar_select %p69, %s70, %s71
      %p75 = pneg %p69
      %p76 = scmp.eq.s32.totalorder %s20, 1
      %p77 = por %p75, %p76
      %p78 = scmp.ne.s32.totalorder %s70, %s73
      %p79 = scmp.eq.s32.totalorder %s20, 0
      %p80 = por %p78, %p79
      %p81 = scmp.ne.s32.totalorder %s70, %s73
      %p82 = scmp.eq.s32.totalorder %s25, 1
      %p83 = por %p81, %p82
      %p84 = scmp.ne.s32.totalorder %s73, %s74
      %p85 = scmp.eq.s32.totalorder %s25, 0
      %p86 = por %p84, %p85
      %p87 = scmp.ne.s32.totalorder %s73, %s74
      %p88 = scmp.eq.s32.totalorder %s26, 1
      %p89 = por %p87, %p88
      %p91 = scmp.ne.s32.totalorder %s74, %s90
      %p92 = scmp.eq.s32.totalorder %s26, 0
      %p93 = por %p91, %p92
      %s94 = ssub.s32 %s27, %s39
      %p95 = scmp.eq.s32.totalorder %s94, 0
      %s97 = sadd.s32 %s96, 1
      %s98 = scalar_select %p95, %s96, %s97
      %p101 = pneg %p95
      %p102 = scmp.eq.s32.totalorder %s20, 1
      %p103 = por %p101, %p102
      %p104 = scmp.ne.s32.totalorder %s96, %s99
      %p105 = scmp.eq.s32.totalorder %s20, 0
      %p106 = por %p104, %p105
      %p107 = scmp.ne.s32.totalorder %s96, %s99
      %p108 = scmp.eq.s32.totalorder %s25, 1
      %p109 = por %p107, %p108
      %p110 = scmp.ne.s32.totalorder %s99, %s100
      %p111 = scmp.eq.s32.totalorder %s25, 0
      %p112 = por %p110, %p111
      %p113 = scmp.ne.s32.totalorder %s99, %s100
      %p114 = scmp.eq.s32.totalorder %s26, 1
      %p115 = por %p113, %p114
      %p117 = scmp.ne.s32.totalorder %s100, %s116
      %p118 = scmp.eq.s32.totalorder %s26, 0
      %p119 = por %p117, %p118
      %s120 = ssub.s32 %s27, %s39
      %p121 = scmp.eq.s32.totalorder %s120, 0
      %s123 = sadd.s32 %s122, 1
      %s124 = scalar_select %p121, %s122, %s123
      %p127 = pneg %p121
      %p128 = scmp.eq.s32.totalorder %s20, 1
      %p129 = por %p127, %p128
      %p130 = scmp.ne.s32.totalorder %s122, %s125
      %p131 = scmp.eq.s32.totalorder %s20, 0
      %p132 = por %p130, %p131
      %p133 = scmp.ne.s32.totalorder %s122, %s125
      %p134 = scmp.eq.s32.totalorder %s25, 1
      %p135 = por %p133, %p134
      %p136 = scmp.ne.s32.totalorder %s125, %s126
      %p137 = scmp.eq.s32.totalorder %s25, 0
      %p138 = por %p136, %p137
      %p139 = scmp.ne.s32.totalorder %s125, %s126
      %p140 = scmp.eq.s32.totalorder %s26, 1
      %p141 = por %p139, %p140
      %p143 = scmp.ne.s32.totalorder %s126, %s142
      %p144 = scmp.eq.s32.totalorder %s26, 0
      %p145 = por %p143, %p144
      %p146 = scmp.le.s32.totalorder 1, %s20
      %p147 = scmp.lt.s32.totalorder %s20, 3
      %p148 = pnand %p146, %p147
      %p149 = pneg %p148
      // Predicated region
      $region9: #{tpu_custom_call.1} parent=5 // pred_check
        _
      $region10: #{tpu_custom_call.1} parent=5 // pred_check_branch
        %151 = sbr.rel (%p148) target = $region12
      $region11: #{tpu_custom_call.1} parent=5 // pred_region
        %s152 = ssub.s32 %s20, 1
        // Predicated region
        $region13: #{tpu_custom_call.1} parent=11 // pred_check
          %p153 = pneg %p86
        $region14: #{tpu_custom_call.1} parent=11 // pred_check_branch
          %155 = sbr.rel (%p153) target = $region16
        $region15: #{tpu_custom_call.1} parent=11 // pred_region
          %s156 = smul.u32 16, %s30
          %s158 = ssub.s32 1024, 1024
          %159 = vsyncadd [#allocation7], %s158
          %s160 = smul.addr %s156, 64
          %s161 = scalar_lea.hbm %s1, %s160
          %s162 = sshll.u32 [#allocation6], 4
          %s163 = int_to_ptr.vmem [resolvable:$true] %s162
          %168 = dma.hbm_to_vmem [thread:$0]  %s161, 1024, %s163, [#allocation7], 64, 64, 4
        $region16: #{tpu_custom_call.1} parent=11 // pred_fallthru
          _
      $region12: #{tpu_custom_call.1} parent=5 // pred_fallthru
        _
      %p169 = scmp.lt.s32.totalorder %s20, 2
      // Predicated region
      $region17: #{tpu_custom_call.1} parent=5 // pred_check
        %p170 = pneg %p169
      $region18: #{tpu_custom_call.1} parent=5 // pred_check_branch
        %172 = sbr.rel (%p170) target = $region20
      $region19: #{tpu_custom_call.1} parent=5 // pred_region
        // Predicated region
        $region21: #{tpu_custom_call.1} parent=19 // pred_check
          %p173 = pneg %p54
        $region22: #{tpu_custom_call.1} parent=19 // pred_check_branch
          %175 = sbr.rel (%p173) target = $region24
        $region23: #{tpu_custom_call.1} parent=19 // pred_region
          %s176 = sand.u32 %s44, 1
          %s177 = scalar_lea.sflag [#allocation4], %s176
          %s178 = sand.u32 %s44, 1
          %s179 = smul.addr %s178, 128
          %s180 = scalar_lea.vmem [#allocation3], %s179
          %s181 = smul.u32 32, %s27
          %s183 = ssub.s32 2048, 2048
          %184 = vsyncadd %s177, %s183
          %s185 = sadd.s32 %s28, %s181
          %s186 = smul.addr %s185, 64
          %s187 = scalar_lea.hbm %s0, %s186
          %s188 = sshll.u32 %s180, 4
          %s189 = int_to_ptr.vmem [resolvable:$true] %s188
          %194 = dma.hbm_to_vmem [thread:$0]  %s187, 2048, %s189, %s177, 64, 64, 4
        $region24: #{tpu_custom_call.1} parent=19 // pred_fallthru
          _
      $region20: #{tpu_custom_call.1} parent=5 // pred_fallthru
        _
      %p195 = scmp.le.s32.totalorder 1, %s20
      %p196 = scmp.lt.s32.totalorder %s20, 3
      %p197 = pnand %p195, %p196
      %p198 = pneg %p197
      // Predicated region
      $region25: #{tpu_custom_call.1} parent=5 // pred_check
        _
      $region26: #{tpu_custom_call.1} parent=5 // pred_check_branch
        %200 = sbr.rel (%p197) target = $region28
      $region27: #{tpu_custom_call.1} parent=5 // pred_region
        %s201 = ssub.s32 %s20, 1
        %s202 = sand.u32 %s47, 1
        %s203 = scalar_lea.sflag [#allocation4], %s202
        %s204 = sand.u32 %s47, 1
        %s205 = smul.addr %s204, 128
        %s206 = scalar_lea.vmem [#allocation3], %s205
        // Predicated region
        $region29: #{tpu_custom_call.1} parent=27 // pred_check
          %p207 = pneg %p60
        $region30: #{tpu_custom_call.1} parent=27 // pred_check_branch
          %209 = sbr.rel (%p207) target = $region32
        $region31: #{tpu_custom_call.1} parent=27 // pred_region
          %210 = dma.done %s203, 2048
        $region32: #{tpu_custom_call.1} parent=27 // pred_fallthru
          _
        // Predicated region
        $region33: #{tpu_custom_call.1} parent=27 // pred_check
          %p211 = pneg %p86
        $region34: #{tpu_custom_call.1} parent=27 // pred_check_branch
          %213 = sbr.rel (%p211) target = $region36
        $region35: #{tpu_custom_call.1} parent=27 // pred_region
          %214 = dma.done [#allocation7], 1024
        $region36: #{tpu_custom_call.1} parent=27 // pred_fallthru
          _
        %s215 = sand.u32 %s47, 1
        %s216 = scalar_lea.sflag [#allocation4], %s215
        %s217 = sand.u32 %s47, 1
        %s218 = smul.addr %s217, 128
        %s219 = scalar_lea.vmem [#allocation3], %s218
        %p220 = pneg %p60
        %p221 = pneg %p57
        %p222 = pneg %p86
        %p223 = pneg %p83
        %p224 = pneg %p112
        %p225 = pneg %p109
        %s226 = sand.u32 %s99, 1
        %s227 = scalar_lea.sflag [#allocation5], %s226
        %s228 = sand.u32 %s99, 1
        %s229 = smul.addr %s228, 128
        %s230 = scalar_lea.vmem [#allocation8], %s229
        %p231 = pneg %p138
        %p232 = pneg %p135
        %s233 = sand.u32 %s125, 1
        %s234 = scalar_lea.sflag [#allocation10], %s233
        %s235 = sand.u32 %s125, 1
        %s236 = smul.addr %s235, 8
        %s237 = scalar_lea.vmem [#allocation9], %s236
        %s238 = smul.u32 32, %s29
        %s239 = smul.u32 16, %s30
        %s240 = smul.u32 32, %s29
        %p242 = scmp.eq.s32.totalorder %s30, 0
        // Predicated region
        $region37: #{tpu_custom_call.1} parent=27 // pred_check
          %p243 = pneg %p242
        $region38: #{tpu_custom_call.1} parent=27 // pred_check_branch
          %245 = sbr.rel (%p243) target = $region40
        $region39: #{tpu_custom_call.1} parent=27 // pred_region
          %246 = vst [vmem:[#allocation2] sm:$0xff] 0.0
          %247 = vst [vmem:[#allocation2 + $0x8] sm:$0xff] 0.0
          %248 = vst [vmem:[#allocation2 + $0x10] sm:$0xff] 0.0
          %249 = vst [vmem:[#allocation2 + $0x18] sm:$0xff] 0.0
          %250 = vst [vmem:[#allocation2 + $0x20] sm:$0xff] 0.0
          %251 = vst [vmem:[#allocation2 + $0x28] sm:$0xff] 0.0
          %252 = vst [vmem:[#allocation2 + $0x30] sm:$0xff] 0.0
          %253 = vst [vmem:[#allocation2 + $0x38] sm:$0xff] 0.0
          %254 = vst [vmem:[#allocation2 + $0x40] sm:$0xff] 0.0
          %255 = vst [vmem:[#allocation2 + $0x48] sm:$0xff] 0.0
          %256 = vst [vmem:[#allocation2 + $0x50] sm:$0xff] 0.0
          %257 = vst [vmem:[#allocation2 + $0x58] sm:$0xff] 0.0
          %258 = vst [vmem:[#allocation2 + $0x60] sm:$0xff] 0.0
          %259 = vst [vmem:[#allocation2 + $0x68] sm:$0xff] 0.0
          %260 = vst [vmem:[#allocation2 + $0x70] sm:$0xff] 0.0
          %261 = vst [vmem:[#allocation2 + $0x78] sm:$0xff] 0.0
          %262 = vst [vmem:[#allocation2 + $0x80] sm:$0xff] 0.0
          %263 = vst [vmem:[#allocation2 + $0x88] sm:$0xff] 0.0
          %264 = vst [vmem:[#allocation2 + $0x90] sm:$0xff] 0.0
          %265 = vst [vmem:[#allocation2 + $0x98] sm:$0xff] 0.0
          %266 = vst [vmem:[#allocation2 + $0xa0] sm:$0xff] 0.0
          %267 = vst [vmem:[#allocation2 + $0xa8] sm:$0xff] 0.0
          %268 = vst [vmem:[#allocation2 + $0xb0] sm:$0xff] 0.0
          %269 = vst [vmem:[#allocation2 + $0xb8] sm:$0xff] 0.0
          %270 = vst [vmem:[#allocation2 + $0xc0] sm:$0xff] 0.0
          %271 = vst [vmem:[#allocation2 + $0xc8] sm:$0xff] 0.0
          %272 = vst [vmem:[#allocation2 + $0xd0] sm:$0xff] 0.0
          %273 = vst [vmem:[#allocation2 + $0xd8] sm:$0xff] 0.0
          %274 = vst [vmem:[#allocation2 + $0xe0] sm:$0xff] 0.0
          %275 = vst [vmem:[#allocation2 + $0xe8] sm:$0xff] 0.0
          %276 = vst [vmem:[#allocation2 + $0xf0] sm:$0xff] 0.0
          %277 = vst [vmem:[#allocation2 + $0xf8] sm:$0xff] 0.0
        $region40: #{tpu_custom_call.1} parent=27 // pred_fallthru
          _
        %v278 = vld [vmem:[#allocation2] sm:$0xff]
        %v279 = vld [vmem:[#allocation2 + $0x8] sm:$0xff]
        %v280 = vld [vmem:[#allocation2 + $0x10] sm:$0xff]
        %v281 = vld [vmem:[#allocation2 + $0x18] sm:$0xff]
        %v282 = vld [vmem:[#allocation2 + $0x20] sm:$0xff]
        %v283 = vld [vmem:[#allocation2 + $0x28] sm:$0xff]
        %v284 = vld [vmem:[#allocation2 + $0x30] sm:$0xff]
        %v285 = vld [vmem:[#allocation2 + $0x38] sm:$0xff]
        %v286 = vld [vmem:[#allocation2 + $0x40] sm:$0xff]
        %v287 = vld [vmem:[#allocation2 + $0x48] sm:$0xff]
        %v288 = vld [vmem:[#allocation2 + $0x50] sm:$0xff]
        %v289 = vld [vmem:[#allocation2 + $0x58] sm:$0xff]
        %v290 = vld [vmem:[#allocation2 + $0x60] sm:$0xff]
        %v291 = vld [vmem:[#allocation2 + $0x68] sm:$0xff]
        %v292 = vld [vmem:[#allocation2 + $0x70] sm:$0xff]
        %v293 = vld [vmem:[#allocation2 + $0x78] sm:$0xff]
        %v294 = vld [vmem:[#allocation2 + $0x80] sm:$0xff]
        %v295 = vld [vmem:[#allocation2 + $0x88] sm:$0xff]
        %v296 = vld [vmem:[#allocation2 + $0x90] sm:$0xff]
        %v297 = vld [vmem:[#allocation2 + $0x98] sm:$0xff]
        %v298 = vld [vmem:[#allocation2 + $0xa0] sm:$0xff]
        %v299 = vld [vmem:[#allocation2 + $0xa8] sm:$0xff]
        %v300 = vld [vmem:[#allocation2 + $0xb0] sm:$0xff]
        %v301 = vld [vmem:[#allocation2 + $0xb8] sm:$0xff]
        %v302 = vld [vmem:[#allocation2 + $0xc0] sm:$0xff]
        %v303 = vld [vmem:[#allocation2 + $0xc8] sm:$0xff]
        %v304 = vld [vmem:[#allocation2 + $0xd0] sm:$0xff]
        %v305 = vld [vmem:[#allocation2 + $0xd8] sm:$0xff]
        %v306 = vld [vmem:[#allocation2 + $0xe0] sm:$0xff]
        %v307 = vld [vmem:[#allocation2 + $0xe8] sm:$0xff]
        %v308 = vld [vmem:[#allocation2 + $0xf0] sm:$0xff]
        %v309 = vld [vmem:[#allocation2 + $0xf8] sm:$0xff]
        %v310 = vld [vmem:[%s206] sm:$0xf]
        %v311 = vld [vmem:[%s206 + $0x4] sm:$0xf]
        %v312 = vld [vmem:[%s206 + $0x8] sm:$0xf]
        %v313 = vld [vmem:[%s206 + $0xc] sm:$0xf]
        %v314 = vld [vmem:[%s206 + $0x10] sm:$0xf]
        %v315 = vld [vmem:[%s206 + $0x14] sm:$0xf]
        %v316 = vld [vmem:[%s206 + $0x18] sm:$0xf]
        %v317 = vld [vmem:[%s206 + $0x1c] sm:$0xf]
        %v318 = vld [vmem:[%s206 + $0x20] sm:$0xf]
        %v319 = vld [vmem:[%s206 + $0x24] sm:$0xf]
        %v320 = vld [vmem:[%s206 + $0x28] sm:$0xf]
        %v321 = vld [vmem:[%s206 + $0x2c] sm:$0xf]
        %v322 = vld [vmem:[%s206 + $0x30] sm:$0xf]
        %v323 = vld [vmem:[%s206 + $0x34] sm:$0xf]
        %v324 = vld [vmem:[%s206 + $0x38] sm:$0xf]
        %v325 = vld [vmem:[%s206 + $0x3c] sm:$0xf]
        %v326 = vld [vmem:[%s206 + $0x40] sm:$0xf]
        %v327 = vld [vmem:[%s206 + $0x44] sm:$0xf]
        %v328 = vld [vmem:[%s206 + $0x48] sm:$0xf]
        %v329 = vld [vmem:[%s206 + $0x4c] sm:$0xf]
        %v330 = vld [vmem:[%s206 + $0x50] sm:$0xf]
        %v331 = vld [vmem:[%s206 + $0x54] sm:$0xf]
        %v332 = vld [vmem:[%s206 + $0x58] sm:$0xf]
        %v333 = vld [vmem:[%s206 + $0x5c] sm:$0xf]
        %v334 = vld [vmem:[%s206 + $0x60] sm:$0xf]
        %v335 = vld [vmem:[%s206 + $0x64] sm:$0xf]
        %v336 = vld [vmem:[%s206 + $0x68] sm:$0xf]
        %v337 = vld [vmem:[%s206 + $0x6c] sm:$0xf]
        %v338 = vld [vmem:[%s206 + $0x70] sm:$0xf]
        %v339 = vld [vmem:[%s206 + $0x74] sm:$0xf]
        %v340 = vld [vmem:[%s206 + $0x78] sm:$0xf]
        %v341 = vld [vmem:[%s206 + $0x7c] sm:$0xf]
        %v342 = vld [vmem:[#allocation6] sm:$0xf]
        %v343 = vld [vmem:[#allocation6 + $0x4] sm:$0xf]
        %v344 = vld [vmem:[#allocation6 + $0x8] sm:$0xf]
        %v345 = vld [vmem:[#allocation6 + $0xc] sm:$0xf]
        %v346 = vld [vmem:[#allocation6 + $0x10] sm:$0xf]
        %v347 = vld [vmem:[#allocation6 + $0x14] sm:$0xf]
        %v348 = vld [vmem:[#allocation6 + $0x18] sm:$0xf]
        %v349 = vld [vmem:[#allocation6 + $0x1c] sm:$0xf]
        %v350 = vld [vmem:[#allocation6 + $0x20] sm:$0xf]
        %v351 = vld [vmem:[#allocation6 + $0x24] sm:$0xf]
        %v352 = vld [vmem:[#allocation6 + $0x28] sm:$0xf]
        %v353 = vld [vmem:[#allocation6 + $0x2c] sm:$0xf]
        %v354 = vld [vmem:[#allocation6 + $0x30] sm:$0xf]
        %v355 = vld [vmem:[#allocation6 + $0x34] sm:$0xf]
        %v356 = vld [vmem:[#allocation6 + $0x38] sm:$0xf]
        %v357 = vld [vmem:[#allocation6 + $0x3c] sm:$0xf]
        %v390 = vunpack.c.l.b16 %v310
        %v391 = vunpack.c.l.b16 %v311
        %v392 = vunpack.c.l.b16 %v312
        %v393 = vunpack.c.l.b16 %v313
        %v394 = vunpack.c.l.b16 %v314
        %v395 = vunpack.c.l.b16 %v315
        %v396 = vunpack.c.l.b16 %v316
        %v397 = vunpack.c.l.b16 %v317
        %v398 = vunpack.c.l.b16 %v318
        %v399 = vunpack.c.l.b16 %v319
        %v400 = vunpack.c.l.b16 %v320
        %v401 = vunpack.c.l.b16 %v321
        %v402 = vunpack.c.l.b16 %v322
        %v403 = vunpack.c.l.b16 %v323
        %v404 = vunpack.c.l.b16 %v324
        %v405 = vunpack.c.l.b16 %v325
        %v406 = vunpack.c.l.b16 %v326
        %v407 = vunpack.c.l.b16 %v327
        %v408 = vunpack.c.l.b16 %v328
        %v409 = vunpack.c.l.b16 %v329
        %v410 = vunpack.c.l.b16 %v330
        %v411 = vunpack.c.l.b16 %v331
        %v412 = vunpack.c.l.b16 %v332
        %v413 = vunpack.c.l.b16 %v333
        %v414 = vunpack.c.l.b16 %v334
        %v415 = vunpack.c.l.b16 %v335
        %v416 = vunpack.c.l.b16 %v336
        %v417 = vunpack.c.l.b16 %v337
        %v418 = vunpack.c.l.b16 %v338
        %v419 = vunpack.c.l.b16 %v339
        %v420 = vunpack.c.l.b16 %v340
        %v421 = vunpack.c.l.b16 %v341
        %v422 = vpack.c.b16 %v391, %v390
        %v423 = vpack.c.b16 %v393, %v392
        %v424 = vpack.c.b16 %v395, %v394
        %v425 = vpack.c.b16 %v397, %v396
        %v426 = vpack.c.b16 %v399, %v398
        %v427 = vpack.c.b16 %v401, %v400
        %v428 = vpack.c.b16 %v403, %v402
        %v429 = vpack.c.b16 %v405, %v404
        %v430 = vpack.c.b16 %v407, %v406
        %v431 = vpack.c.b16 %v409, %v408
        %v432 = vpack.c.b16 %v411, %v410
        %v433 = vpack.c.b16 %v413, %v412
        %v434 = vpack.c.b16 %v415, %v414
        %v435 = vpack.c.b16 %v417, %v416
        %v436 = vpack.c.b16 %v419, %v418
        %v437 = vpack.c.b16 %v421, %v420
        %v470 = vunpack.c.l.b16 %v342
        %v471 = vunpack.c.l.b16 %v343
        %v472 = vunpack.c.l.b16 %v344
        %v473 = vunpack.c.l.b16 %v345
        %v474 = vunpack.c.l.b16 %v346
        %v475 = vunpack.c.l.b16 %v347
        %v476 = vunpack.c.l.b16 %v348
        %v477 = vunpack.c.l.b16 %v349
        %v478 = vunpack.c.l.b16 %v350
        %v479 = vunpack.c.l.b16 %v351
        %v480 = vunpack.c.l.b16 %v352
        %v481 = vunpack.c.l.b16 %v353
        %v482 = vunpack.c.l.b16 %v354
        %v483 = vunpack.c.l.b16 %v355
        %v484 = vunpack.c.l.b16 %v356
        %v485 = vunpack.c.l.b16 %v357
        %v486 = vpack.c.b16 %v471, %v470
        %v487 = vpack.c.b16 %v473, %v472
        %v488 = vpack.c.b16 %v475, %v474
        %v489 = vpack.c.b16 %v477, %v476
        %v490 = vpack.c.b16 %v479, %v478
        %v491 = vpack.c.b16 %v481, %v480
        %v492 = vpack.c.b16 %v483, %v482
        %v493 = vpack.c.b16 %v485, %v484
        %502 = vmatprep.subr.bf16.mxu0 0
        %503 = vmatpush1.bf16.msra.mxu0 %v493
        %504 = vmatprep.subr.bf16.mxu0 0
        %505 = vmatpush1.bf16.msra.mxu0 %v492
        %506 = vmatprep.subr.bf16.mxu0 0
        %507 = vmatpush1.bf16.msra.mxu0 %v491
        %508 = vmatprep.subr.bf16.mxu0 0
        %509 = vmatpush1.bf16.msra.mxu0 %v490
        %510 = vmatprep.subr.bf16.mxu0 0
        %511 = vmatpush1.bf16.msra.mxu0 %v489
        %512 = vmatprep.subr.bf16.mxu0 0
        %513 = vmatpush1.bf16.msra.mxu0 %v488
        %514 = vmatprep.subr.bf16.mxu0 0
        %515 = vmatpush1.bf16.msra.mxu0 %v487
        %516 = vmatprep.subr.bf16.mxu0 0
        %517 = vmatpush1.bf16.msra.mxu0 %v486
        %518 = vmatprep.subr.bf16.mxu0 0
        %519 = vmatpush2.bf16.msra.mxu0 0
        %520 = vmatprep.subr.bf16.mxu0 0
        %521 = vmatpush2.bf16.msra.mxu0 0
        %522 = vmatprep.subr.bf16.mxu0 0
        %523 = vmatpush2.bf16.msra.mxu0 0
        %524 = vmatprep.subr.bf16.mxu0 0
        %525 = vmatpush2.bf16.msra.mxu0 0
        %526 = vmatprep.subr.bf16.mxu0 0
        %527 = vmatpush2.bf16.msra.mxu0 0
        %528 = vmatprep.subr.bf16.mxu0 0
        %529 = vmatpush2.bf16.msra.mxu0 0
        %530 = vmatprep.subr.bf16.mxu0 0
        %531 = vmatpush2.bf16.msra.mxu0 0
        %532 = vmatprep.subr.bf16.mxu0 0
        %533 = vmatpush2.bf16.msra.mxu0 0
        %534 = vmatprep.mubr.bf16.mxu0 0
        %535 = vmatmul.mubr.bf16.gmra.mxu0 %v422
        %v536 = vpop.f32.mrf.mxu0
        %v537 = vadd.f32 0.0, %v536
        %v538 = vpop.f32.mrf.mxu0
        %v539 = vpop.f32.mrf.mxu0
        %v540 = vadd.f32 0.0, %v539
        %v541 = vpop.f32.mrf.mxu0
        %542 = vmatprep.mubr.bf16.mxu0 0
        %543 = vmatmul.mubr.bf16.gmra.mxu0 %v423
        %v544 = vpop.f32.mrf.mxu0
        %v545 = vadd.f32 0.0, %v544
        %v546 = vpop.f32.mrf.mxu0
        %v547 = vpop.f32.mrf.mxu0
        %v548 = vadd.f32 0.0, %v547
        %v549 = vpop.f32.mrf.mxu0
        %550 = vmatprep.mubr.bf16.mxu0 0
        %551 = vmatmul.mubr.bf16.gmra.mxu0 %v424
        %v552 = vpop.f32.mrf.mxu0
        %v553 = vadd.f32 0.0, %v552
        %v554 = vpop.f32.mrf.mxu0
        %v555 = vpop.f32.mrf.mxu0
        %v556 = vadd.f32 0.0, %v555
        %v557 = vpop.f32.mrf.mxu0
        %558 = vmatprep.mubr.bf16.mxu0 0
        %559 = vmatmul.mubr.bf16.gmra.mxu0 %v425
        %v560 = vpop.f32.mrf.mxu0
        %v561 = vadd.f32 0.0, %v560
        %v562 = vpop.f32.mrf.mxu0
        %v563 = vpop.f32.mrf.mxu0
        %v564 = vadd.f32 0.0, %v563
        %v565 = vpop.f32.mrf.mxu0
        %566 = vmatprep.mubr.bf16.mxu0 0
        %567 = vmatmul.mubr.bf16.gmra.mxu0 %v426
        %v568 = vpop.f32.mrf.mxu0
        %v569 = vadd.f32 0.0, %v568
        %v570 = vpop.f32.mrf.mxu0
        %v571 = vpop.f32.mrf.mxu0
        %v572 = vadd.f32 0.0, %v571
        %v573 = vpop.f32.mrf.mxu0
        %574 = vmatprep.mubr.bf16.mxu0 0
        %575 = vmatmul.mubr.bf16.gmra.mxu0 %v427
        %v576 = vpop.f32.mrf.mxu0
        %v577 = vadd.f32 0.0, %v576
        %v578 = vpop.f32.mrf.mxu0
        %v579 = vpop.f32.mrf.mxu0
        %v580 = vadd.f32 0.0, %v579
        %v581 = vpop.f32.mrf.mxu0
        %582 = vmatprep.mubr.bf16.mxu0 0
        %583 = vmatmul.mubr.bf16.gmra.mxu0 %v428
        %v584 = vpop.f32.mrf.mxu0
        %v585 = vadd.f32 0.0, %v584
        %v586 = vpop.f32.mrf.mxu0
        %v587 = vpop.f32.mrf.mxu0
        %v588 = vadd.f32 0.0, %v587
        %v589 = vpop.f32.mrf.mxu0
        %590 = vmatprep.mubr.bf16.mxu0 0
        %591 = vmatmul.mubr.bf16.gmra.mxu0 %v429
        %v592 = vpop.f32.mrf.mxu0
        %v593 = vadd.f32 0.0, %v592
        %v594 = vpop.f32.mrf.mxu0
        %v595 = vpop.f32.mrf.mxu0
        %v596 = vadd.f32 0.0, %v595
        %v597 = vpop.f32.mrf.mxu0
        %598 = vmatprep.mubr.bf16.mxu0 0
        %599 = vmatmul.mubr.bf16.gmra.mxu0 %v430
        %v600 = vpop.f32.mrf.mxu0
        %v601 = vadd.f32 0.0, %v600
        %v602 = vpop.f32.mrf.mxu0
        %v603 = vpop.f32.mrf.mxu0
        %v604 = vadd.f32 0.0, %v603
        %v605 = vpop.f32.mrf.mxu0
        %606 = vmatprep.mubr.bf16.mxu0 0
        %607 = vmatmul.mubr.bf16.gmra.mxu0 %v431
        %v608 = vpop.f32.mrf.mxu0
        %v609 = vadd.f32 0.0, %v608
        %v610 = vpop.f32.mrf.mxu0
        %v611 = vpop.f32.mrf.mxu0
        %v612 = vadd.f32 0.0, %v611
        %v613 = vpop.f32.mrf.mxu0
        %614 = vmatprep.mubr.bf16.mxu0 0
        %615 = vmatmul.mubr.bf16.gmra.mxu0 %v432
        %v616 = vpop.f32.mrf.mxu0
        %v617 = vadd.f32 0.0, %v616
        %v618 = vpop.f32.mrf.mxu0
        %v619 = vpop.f32.mrf.mxu0
        %v620 = vadd.f32 0.0, %v619
        %v621 = vpop.f32.mrf.mxu0
        %622 = vmatprep.mubr.bf16.mxu0 0
        %623 = vmatmul.mubr.bf16.gmra.mxu0 %v433
        %v624 = vpop.f32.mrf.mxu0
        %v625 = vadd.f32 0.0, %v624
        %v626 = vpop.f32.mrf.mxu0
        %v627 = vpop.f32.mrf.mxu0
        %v628 = vadd.f32 0.0, %v627
        %v629 = vpop.f32.mrf.mxu0
        %630 = vmatprep.mubr.bf16.mxu0 0
        %631 = vmatmul.mubr.bf16.gmra.mxu0 %v434
        %v632 = vpop.f32.mrf.mxu0
        %v633 = vadd.f32 0.0, %v632
        %v634 = vpop.f32.mrf.mxu0
        %v635 = vpop.f32.mrf.mxu0
        %v636 = vadd.f32 0.0, %v635
        %v637 = vpop.f32.mrf.mxu0
        %638 = vmatprep.mubr.bf16.mxu0 0
        %639 = vmatmul.mubr.bf16.gmra.mxu0 %v435
        %v640 = vpop.f32.mrf.mxu0
        %v641 = vadd.f32 0.0, %v640
        %v642 = vpop.f32.mrf.mxu0
        %v643 = vpop.f32.mrf.mxu0
        %v644 = vadd.f32 0.0, %v643
        %v645 = vpop.f32.mrf.mxu0
        %646 = vmatprep.mubr.bf16.mxu0 0
        %647 = vmatmul.mubr.bf16.gmra.mxu0 %v436
        %v648 = vpop.f32.mrf.mxu0
        %v649 = vadd.f32 0.0, %v648
        %v650 = vpop.f32.mrf.mxu0
        %v651 = vpop.f32.mrf.mxu0
        %v652 = vadd.f32 0.0, %v651
        %v653 = vpop.f32.mrf.mxu0
        %654 = vmatprep.mubr.bf16.mxu0 0
        %655 = vmatmul.mubr.bf16.gmra.mxu0 %v437
        %v656 = vpop.f32.mrf.mxu0
        %v657 = vadd.f32 0.0, %v656
        %v658 = vpop.f32.mrf.mxu0
        %v659 = vpop.f32.mrf.mxu0
        %v660 = vadd.f32 0.0, %v659
        %v661 = vpop.f32.mrf.mxu0
        %662 = vdwg.mxu0
        %v663 = vadd.f32 %v278, %v537
        %v664 = vadd.f32 %v279, %v540
        %v665 = vadd.f32 %v280, %v545
        %v666 = vadd.f32 %v281, %v548
        %v667 = vadd.f32 %v282, %v553
        %v668 = vadd.f32 %v283, %v556
        %v669 = vadd.f32 %v284, %v561
        %v670 = vadd.f32 %v285, %v564
        %v671 = vadd.f32 %v286, %v569
        %v672 = vadd.f32 %v287, %v572
        %v673 = vadd.f32 %v288, %v577
        %v674 = vadd.f32 %v289, %v580
        %v675 = vadd.f32 %v290, %v585
        %v676 = vadd.f32 %v291, %v588
        %v677 = vadd.f32 %v292, %v593
        %v678 = vadd.f32 %v293, %v596
        %v679 = vadd.f32 %v294, %v601
        %v680 = vadd.f32 %v295, %v604
        %v681 = vadd.f32 %v296, %v609
        %v682 = vadd.f32 %v297, %v612
        %v683 = vadd.f32 %v298, %v617
        %v684 = vadd.f32 %v299, %v620
        %v685 = vadd.f32 %v300, %v625
        %v686 = vadd.f32 %v301, %v628
        %v687 = vadd.f32 %v302, %v633
        %v688 = vadd.f32 %v303, %v636
        %v689 = vadd.f32 %v304, %v641
        %v690 = vadd.f32 %v305, %v644
        %v691 = vadd.f32 %v306, %v649
        %v692 = vadd.f32 %v307, %v652
        %v693 = vadd.f32 %v308, %v657
        %v694 = vadd.f32 %v309, %v660
        %695 = vst [vmem:[#allocation2] sm:$0xff] %v663
        %696 = vst [vmem:[#allocation2 + $0x8] sm:$0xff] %v664
        %697 = vst [vmem:[#allocation2 + $0x10] sm:$0xff] %v665
        %698 = vst [vmem:[#allocation2 + $0x18] sm:$0xff] %v666
        %699 = vst [vmem:[#allocation2 + $0x20] sm:$0xff] %v667
        %700 = vst [vmem:[#allocation2 + $0x28] sm:$0xff] %v668
        %701 = vst [vmem:[#allocation2 + $0x30] sm:$0xff] %v669
        %702 = vst [vmem:[#allocation2 + $0x38] sm:$0xff] %v670
        %703 = vst [vmem:[#allocation2 + $0x40] sm:$0xff] %v671
        %704 = vst [vmem:[#allocation2 + $0x48] sm:$0xff] %v672
        %705 = vst [vmem:[#allocation2 + $0x50] sm:$0xff] %v673
        %706 = vst [vmem:[#allocation2 + $0x58] sm:$0xff] %v674
        %707 = vst [vmem:[#allocation2 + $0x60] sm:$0xff] %v675
        %708 = vst [vmem:[#allocation2 + $0x68] sm:$0xff] %v676
        %709 = vst [vmem:[#allocation2 + $0x70] sm:$0xff] %v677
        %710 = vst [vmem:[#allocation2 + $0x78] sm:$0xff] %v678
        %711 = vst [vmem:[#allocation2 + $0x80] sm:$0xff] %v679
        %712 = vst [vmem:[#allocation2 + $0x88] sm:$0xff] %v680
        %713 = vst [vmem:[#allocation2 + $0x90] sm:$0xff] %v681
        %714 = vst [vmem:[#allocation2 + $0x98] sm:$0xff] %v682
        %715 = vst [vmem:[#allocation2 + $0xa0] sm:$0xff] %v683
        %716 = vst [vmem:[#allocation2 + $0xa8] sm:$0xff] %v684
        %717 = vst [vmem:[#allocation2 + $0xb0] sm:$0xff] %v685
        %718 = vst [vmem:[#allocation2 + $0xb8] sm:$0xff] %v686
        %719 = vst [vmem:[#allocation2 + $0xc0] sm:$0xff] %v687
        %720 = vst [vmem:[#allocation2 + $0xc8] sm:$0xff] %v688
        %721 = vst [vmem:[#allocation2 + $0xd0] sm:$0xff] %v689
        %722 = vst [vmem:[#allocation2 + $0xd8] sm:$0xff] %v690
        %723 = vst [vmem:[#allocation2 + $0xe0] sm:$0xff] %v691
        %724 = vst [vmem:[#allocation2 + $0xe8] sm:$0xff] %v692
        %725 = vst [vmem:[#allocation2 + $0xf0] sm:$0xff] %v693
        %726 = vst [vmem:[#allocation2 + $0xf8] sm:$0xff] %v694
        // Predicated region
        $region41: #{tpu_custom_call.1} parent=27 // pred_check
          %p727 = pneg %p242
        $region42: #{tpu_custom_call.1} parent=27 // pred_check_branch
          %729 = sbr.rel (%p727) target = $region44
        $region43: #{tpu_custom_call.1} parent=27 // pred_region
          %v730 = vld [vmem:[#allocation2] sm:$0xff]
          %v731 = vld [vmem:[#allocation2 + $0x8] sm:$0xff]
          %v732 = vld [vmem:[#allocation2 + $0x10] sm:$0xff]
          %v733 = vld [vmem:[#allocation2 + $0x18] sm:$0xff]
          %v734 = vld [vmem:[#allocation2 + $0x20] sm:$0xff]
          %v735 = vld [vmem:[#allocation2 + $0x28] sm:$0xff]
          %v736 = vld [vmem:[#allocation2 + $0x30] sm:$0xff]
          %v737 = vld [vmem:[#allocation2 + $0x38] sm:$0xff]
          %v738 = vld [vmem:[#allocation2 + $0x40] sm:$0xff]
          %v739 = vld [vmem:[#allocation2 + $0x48] sm:$0xff]
          %v740 = vld [vmem:[#allocation2 + $0x50] sm:$0xff]
          %v741 = vld [vmem:[#allocation2 + $0x58] sm:$0xff]
          %v742 = vld [vmem:[#allocation2 + $0x60] sm:$0xff]
          %v743 = vld [vmem:[#allocation2 + $0x68] sm:$0xff]
          %v744 = vld [vmem:[#allocation2 + $0x70] sm:$0xff]
          %v745 = vld [vmem:[#allocation2 + $0x78] sm:$0xff]
          %v746 = vld [vmem:[#allocation2 + $0x80] sm:$0xff]
          %v747 = vld [vmem:[#allocation2 + $0x88] sm:$0xff]
          %v748 = vld [vmem:[#allocation2 + $0x90] sm:$0xff]
          %v749 = vld [vmem:[#allocation2 + $0x98] sm:$0xff]
          %v750 = vld [vmem:[#allocation2 + $0xa0] sm:$0xff]
          %v751 = vld [vmem:[#allocation2 + $0xa8] sm:$0xff]
          %v752 = vld [vmem:[#allocation2 + $0xb0] sm:$0xff]
          %v753 = vld [vmem:[#allocation2 + $0xb8] sm:$0xff]
          %v754 = vld [vmem:[#allocation2 + $0xc0] sm:$0xff]
          %v755 = vld [vmem:[#allocation2 + $0xc8] sm:$0xff]
          %v756 = vld [vmem:[#allocation2 + $0xd0] sm:$0xff]
          %v757 = vld [vmem:[#allocation2 + $0xd8] sm:$0xff]
          %v758 = vld [vmem:[#allocation2 + $0xe0] sm:$0xff]
          %v759 = vld [vmem:[#allocation2 + $0xe8] sm:$0xff]
          %v760 = vld [vmem:[#allocation2 + $0xf0] sm:$0xff]
          %v761 = vld [vmem:[#allocation2 + $0xf8] sm:$0xff]
          %v762 = vpack.c.bf16 %v731, %v730
          %v763 = vpack.c.bf16 %v733, %v732
          %v764 = vpack.c.bf16 %v735, %v734
          %v765 = vpack.c.bf16 %v737, %v736
          %v766 = vpack.c.bf16 %v739, %v738
          %v767 = vpack.c.bf16 %v741, %v740
          %v768 = vpack.c.bf16 %v743, %v742
          %v769 = vpack.c.bf16 %v745, %v744
          %v770 = vpack.c.bf16 %v747, %v746
          %v771 = vpack.c.bf16 %v749, %v748
          %v772 = vpack.c.bf16 %v751, %v750
          %v773 = vpack.c.bf16 %v753, %v752
          %v774 = vpack.c.bf16 %v755, %v754
          %v775 = vpack.c.bf16 %v757, %v756
          %v776 = vpack.c.bf16 %v759, %v758
          %v777 = vpack.c.bf16 %v761, %v760
          %v794 = vunpack.c.l.b16 %v762
          %v795 = vunpack.c.h.b16 %v762
          %v796 = vunpack.c.l.b16 %v763
          %v797 = vunpack.c.h.b16 %v763
          %v798 = vunpack.c.l.b16 %v764
          %v799 = vunpack.c.h.b16 %v764
          %v800 = vunpack.c.l.b16 %v765
          %v801 = vunpack.c.h.b16 %v765
          %v802 = vunpack.c.l.b16 %v766
          %v803 = vunpack.c.h.b16 %v766
          %v804 = vunpack.c.l.b16 %v767
          %v805 = vunpack.c.h.b16 %v767
          %v806 = vunpack.c.l.b16 %v768
          %v807 = vunpack.c.h.b16 %v768
          %v808 = vunpack.c.l.b16 %v769
          %v809 = vunpack.c.h.b16 %v769
          %v810 = vunpack.c.l.b16 %v770
          %v811 = vunpack.c.h.b16 %v770
          %v812 = vunpack.c.l.b16 %v771
          %v813 = vunpack.c.h.b16 %v771
          %v814 = vunpack.c.l.b16 %v772
          %v815 = vunpack.c.h.b16 %v772
          %v816 = vunpack.c.l.b16 %v773
          %v817 = vunpack.c.h.b16 %v773
          %v818 = vunpack.c.l.b16 %v774
          %v819 = vunpack.c.h.b16 %v774
          %v820 = vunpack.c.l.b16 %v775
          %v821 = vunpack.c.h.b16 %v775
          %v822 = vunpack.c.l.b16 %v776
          %v823 = vunpack.c.h.b16 %v776
          %v824 = vunpack.c.l.b16 %v777
          %v825 = vunpack.c.h.b16 %v777
          %v826 = vpack.c.b16 %v794, %v794
          %v827 = vpack.c.b16 %v795, %v795
          %v828 = vpack.c.b16 %v796, %v796
          %v829 = vpack.c.b16 %v797, %v797
          %v830 = vpack.c.b16 %v798, %v798
          %v831 = vpack.c.b16 %v799, %v799
          %v832 = vpack.c.b16 %v800, %v800
          %v833 = vpack.c.b16 %v801, %v801
          %v834 = vpack.c.b16 %v802, %v802
          %v835 = vpack.c.b16 %v803, %v803
          %v836 = vpack.c.b16 %v804, %v804
          %v837 = vpack.c.b16 %v805, %v805
          %v838 = vpack.c.b16 %v806, %v806
          %v839 = vpack.c.b16 %v807, %v807
          %v840 = vpack.c.b16 %v808, %v808
          %v841 = vpack.c.b16 %v809, %v809
          %v842 = vpack.c.b16 %v810, %v810
          %v843 = vpack.c.b16 %v811, %v811
          %v844 = vpack.c.b16 %v812, %v812
          %v845 = vpack.c.b16 %v813, %v813
          %v846 = vpack.c.b16 %v814, %v814
          %v847 = vpack.c.b16 %v815, %v815
          %v848 = vpack.c.b16 %v816, %v816
          %v849 = vpack.c.b16 %v817, %v817
          %v850 = vpack.c.b16 %v818, %v818
          %v851 = vpack.c.b16 %v819, %v819
          %v852 = vpack.c.b16 %v820, %v820
          %v853 = vpack.c.b16 %v821, %v821
          %v854 = vpack.c.b16 %v822, %v822
          %v855 = vpack.c.b16 %v823, %v823
          %v856 = vpack.c.b16 %v824, %v824
          %v857 = vpack.c.b16 %v825, %v825
          %890 = vst [vmem:[%s230] sm:$0xf] %v826
          %891 = vst [vmem:[%s230 + $0x4] sm:$0xf] %v827
          %892 = vst [vmem:[%s230 + $0x8] sm:$0xf] %v828
          %893 = vst [vmem:[%s230 + $0xc] sm:$0xf] %v829
          %894 = vst [vmem:[%s230 + $0x10] sm:$0xf] %v830
          %895 = vst [vmem:[%s230 + $0x14] sm:$0xf] %v831
          %896 = vst [vmem:[%s230 + $0x18] sm:$0xf] %v832
          %897 = vst [vmem:[%s230 + $0x1c] sm:$0xf] %v833
          %898 = vst [vmem:[%s230 + $0x20] sm:$0xf] %v834
          %899 = vst [vmem:[%s230 + $0x24] sm:$0xf] %v835
          %900 = vst [vmem:[%s230 + $0x28] sm:$0xf] %v836
          %901 = vst [vmem:[%s230 + $0x2c] sm:$0xf] %v837
          %902 = vst [vmem:[%s230 + $0x30] sm:$0xf] %v838
          %903 = vst [vmem:[%s230 + $0x34] sm:$0xf] %v839
          %904 = vst [vmem:[%s230 + $0x38] sm:$0xf] %v840
          %905 = vst [vmem:[%s230 + $0x3c] sm:$0xf] %v841
          %906 = vst [vmem:[%s230 + $0x40] sm:$0xf] %v842
          %907 = vst [vmem:[%s230 + $0x44] sm:$0xf] %v843
          %908 = vst [vmem:[%s230 + $0x48] sm:$0xf] %v844
          %909 = vst [vmem:[%s230 + $0x4c] sm:$0xf] %v845
          %910 = vst [vmem:[%s230 + $0x50] sm:$0xf] %v846
          %911 = vst [vmem:[%s230 + $0x54] sm:$0xf] %v847
          %912 = vst [vmem:[%s230 + $0x58] sm:$0xf] %v848
          %913 = vst [vmem:[%s230 + $0x5c] sm:$0xf] %v849
          %914 = vst [vmem:[%s230 + $0x60] sm:$0xf] %v850
          %915 = vst [vmem:[%s230 + $0x64] sm:$0xf] %v851
          %916 = vst [vmem:[%s230 + $0x68] sm:$0xf] %v852
          %917 = vst [vmem:[%s230 + $0x6c] sm:$0xf] %v853
          %918 = vst [vmem:[%s230 + $0x70] sm:$0xf] %v854
          %919 = vst [vmem:[%s230 + $0x74] sm:$0xf] %v855
          %920 = vst [vmem:[%s230 + $0x78] sm:$0xf] %v856
          %921 = vst [vmem:[%s230 + $0x7c] sm:$0xf] %v857
          %v922 = vadd.f32 %v730, %v731
          %v923 = vadd.f32 %v922, %v732
          %v924 = vadd.f32 %v923, %v733
          %v925 = vadd.f32 %v924, %v734
          %v926 = vadd.f32 %v925, %v735
          %v927 = vadd.f32 %v926, %v736
          %v928 = vadd.f32 %v927, %v737
          %v929 = vadd.f32 %v928, %v738
          %v930 = vadd.f32 %v929, %v739
          %v931 = vadd.f32 %v930, %v740
          %v932 = vadd.f32 %v931, %v741
          %v933 = vadd.f32 %v932, %v742
          %v934 = vadd.f32 %v933, %v743
          %v935 = vadd.f32 %v934, %v744
          %v936 = vadd.f32 %v935, %v745
          %v937 = vadd.f32 %v936, %v746
          %v938 = vadd.f32 %v937, %v747
          %v939 = vadd.f32 %v938, %v748
          %v940 = vadd.f32 %v939, %v749
          %v941 = vadd.f32 %v940, %v750
          %v942 = vadd.f32 %v941, %v751
          %v943 = vadd.f32 %v942, %v752
          %v944 = vadd.f32 %v943, %v753
          %v945 = vadd.f32 %v944, %v754
          %v946 = vadd.f32 %v945, %v755
          %v947 = vadd.f32 %v946, %v756
          %v948 = vadd.f32 %v947, %v757
          %v949 = vadd.f32 %v948, %v758
          %v950 = vadd.f32 %v949, %v759
          %v951 = vadd.f32 %v950, %v760
          %v952 = vadd.f32 %v951, %v761
          %v953 = vrot.slane %v952, 4
          %v954 = vadd.f32 %v952, %v953
          %v955 = vrot.slane %v954, 2
          %v956 = vadd.f32 %v954, %v955
          %v957 = vrot.slane %v956, 1
          %v958 = vadd.f32 %v956, %v957
          %959 = vst [vmem:[%s237] sm:$0x1] %v958
          %v960 = vmul.f32 %v730, %v730
          %v961 = vmul.f32 %v731, %v731
          %v962 = vmul.f32 %v732, %v732
          %v963 = vmul.f32 %v733, %v733
          %v964 = vmul.f32 %v734, %v734
          %v965 = vmul.f32 %v735, %v735
          %v966 = vmul.f32 %v736, %v736
          %v967 = vmul.f32 %v737, %v737
          %v968 = vmul.f32 %v738, %v738
          %v969 = vmul.f32 %v739, %v739
          %v970 = vmul.f32 %v740, %v740
          %v971 = vmul.f32 %v741, %v741
          %v972 = vmul.f32 %v742, %v742
          %v973 = vmul.f32 %v743, %v743
          %v974 = vmul.f32 %v744, %v744
          %v975 = vmul.f32 %v745, %v745
          %v976 = vmul.f32 %v746, %v746
          %v977 = vmul.f32 %v747, %v747
          %v978 = vmul.f32 %v748, %v748
          %v979 = vmul.f32 %v749, %v749
          %v980 = vmul.f32 %v750, %v750
          %v981 = vmul.f32 %v751, %v751
          %v982 = vmul.f32 %v752, %v752
          %v983 = vmul.f32 %v753, %v753
          %v984 = vmul.f32 %v754, %v754
          %v985 = vmul.f32 %v755, %v755
          %v986 = vmul.f32 %v756, %v756
          %v987 = vmul.f32 %v757, %v757
          %v988 = vmul.f32 %v758, %v758
          %v989 = vmul.f32 %v759, %v759
          %v990 = vmul.f32 %v760, %v760
          %v991 = vmul.f32 %v761, %v761
          %v992 = vadd.f32 %v960, %v961
          %v993 = vadd.f32 %v992, %v962
          %v994 = vadd.f32 %v993, %v963
          %v995 = vadd.f32 %v994, %v964
          %v996 = vadd.f32 %v995, %v965
          %v997 = vadd.f32 %v996, %v966
          %v998 = vadd.f32 %v997, %v967
          %v999 = vadd.f32 %v998, %v968
          %v1000 = vadd.f32 %v999, %v969
          %v1001 = vadd.f32 %v1000, %v970
          %v1002 = vadd.f32 %v1001, %v971
          %v1003 = vadd.f32 %v1002, %v972
          %v1004 = vadd.f32 %v1003, %v973
          %v1005 = vadd.f32 %v1004, %v974
          %v1006 = vadd.f32 %v1005, %v975
          %v1007 = vadd.f32 %v1006, %v976
          %v1008 = vadd.f32 %v1007, %v977
          %v1009 = vadd.f32 %v1008, %v978
          %v1010 = vadd.f32 %v1009, %v979
          %v1011 = vadd.f32 %v1010, %v980
          %v1012 = vadd.f32 %v1011, %v981
          %v1013 = vadd.f32 %v1012, %v982
          %v1014 = vadd.f32 %v1013, %v983
          %v1015 = vadd.f32 %v1014, %v984
          %v1016 = vadd.f32 %v1015, %v985
          %v1017 = vadd.f32 %v1016, %v986
          %v1018 = vadd.f32 %v1017, %v987
          %v1019 = vadd.f32 %v1018, %v988
          %v1020 = vadd.f32 %v1019, %v989
          %v1021 = vadd.f32 %v1020, %v990
          %v1022 = vadd.f32 %v1021, %v991
          %v1023 = vrot.slane %v1022, 4
          %v1024 = vadd.f32 %v1022, %v1023
          %v1025 = vrot.slane %v1024, 2
          %v1026 = vadd.f32 %v1024, %v1025
          %v1027 = vrot.slane %v1026, 1
          %v1028 = vadd.f32 %v1026, %v1027
          %1029 = vst [vmem:[%s237 + $0x1] sm:$0x1] %v1028
        $region44: #{tpu_custom_call.1} parent=27 // pred_fallthru
          _
        %s1030 = sand.u32 %s99, 1
        %s1031 = scalar_lea.sflag [#allocation5], %s1030
        %s1032 = sand.u32 %s99, 1
        %s1033 = smul.addr %s1032, 128
        %s1034 = scalar_lea.vmem [#allocation8], %s1033
        %s1035 = sand.u32 %s125, 1
        %s1036 = scalar_lea.sflag [#allocation10], %s1035
        %s1037 = sand.u32 %s125, 1
        %s1038 = smul.addr %s1037, 8
        %s1039 = scalar_lea.vmem [#allocation9], %s1038
        // Predicated region
        $region45: #{tpu_custom_call.1} parent=27 // pred_check
          %p1040 = pneg %p109
        $region46: #{tpu_custom_call.1} parent=27 // pred_check_branch
          %1042 = sbr.rel (%p1040) target = $region48
        $region47: #{tpu_custom_call.1} parent=27 // pred_region
          %s1043 = smul.u32 32, %s29
          %s1045 = ssub.s32 2048, 2048
          %1046 = vsyncadd %s1031, %s1045
          %s1047 = smul.addr %s1043, 64
          %s1048 = scalar_lea.hbm %s2, %s1047
          %s1049 = sshll.u32 %s1034, 4
          %s1050 = int_to_ptr.vmem [resolvable:$true] %s1049
          %1055 = dma.vmem_to_hbm [thread:$0]  %s1050, 2048, %s1048, %s1031, 64, 64, 4
        $region48: #{tpu_custom_call.1} parent=27 // pred_fallthru
          _
        // Predicated region
        $region49: #{tpu_custom_call.1} parent=27 // pred_check
          %p1056 = pneg %p135
        $region50: #{tpu_custom_call.1} parent=27 // pred_check_branch
          %1058 = sbr.rel (%p1056) target = $region52
        $region51: #{tpu_custom_call.1} parent=27 // pred_region
          %s1060 = ssub.s32 128, 128
          %1061 = vsyncadd %s1036, %s1060
          %s1062 = smul.addr %s29, 128
          %s1063 = scalar_lea.hbm %s3, %s1062
          %s1065 = sshll.u32 %s1039, 4
          %s1066 = int_to_ptr.vmem [resolvable:$true] %s1065
          %1068 = dma.vmem_to_hbm [thread:$0]  %s1066, 128, %s1063, %s1036
        $region52: #{tpu_custom_call.1} parent=27 // pred_fallthru
          _
      $region28: #{tpu_custom_call.1} parent=5 // pred_fallthru
        _
      %p1069 = scmp.le.s32.totalorder 2, %s20
      // Predicated region
      $region53: #{tpu_custom_call.1} parent=5 // pred_check
        %p1070 = pneg %p1069
      $region54: #{tpu_custom_call.1} parent=5 // pred_check_branch
        %1072 = sbr.rel (%p1070) target = $region56
      $region55: #{tpu_custom_call.1} parent=5 // pred_region
        %s1073 = ssub.s32 %s20, 2
        // Predicated region
        $region57: #{tpu_custom_call.1} parent=55 // pred_check
          %p1074 = pneg %p115
        $region58: #{tpu_custom_call.1} parent=55 // pred_check_branch
          %1076 = sbr.rel (%p1074) target = $region60
        $region59: #{tpu_custom_call.1} parent=55 // pred_region
          %s1077 = sand.u32 %s100, 1
          %s1078 = scalar_lea.sflag [#allocation5], %s1077
          %s1079 = sand.u32 %s100, 1
          %s1080 = smul.addr %s1079, 128
          %s1081 = scalar_lea.vmem [#allocation8], %s1080
          %1082 = dma.done %s1078, 2048
        $region60: #{tpu_custom_call.1} parent=55 // pred_fallthru
          _
        // Predicated region
        $region61: #{tpu_custom_call.1} parent=55 // pred_check
          %p1083 = pneg %p141
        $region62: #{tpu_custom_call.1} parent=55 // pred_check_branch
          %1085 = sbr.rel (%p1083) target = $region64
        $region63: #{tpu_custom_call.1} parent=55 // pred_region
          %s1086 = sand.u32 %s126, 1
          %s1087 = scalar_lea.sflag [#allocation10], %s1086
          %s1088 = sand.u32 %s126, 1
          %s1089 = smul.addr %s1088, 8
          %s1090 = scalar_lea.vmem [#allocation9], %s1089
          %1091 = dma.done %s1087, 128
        $region64: #{tpu_custom_call.1} parent=55 // pred_fallthru
          _
      $region56: #{tpu_custom_call.1} parent=5 // pred_fallthru
        _
    $region6: #{tpu_custom_call.1} parent=1 // loop_footer
      %s24 = sadd.s32 1, %s20
    $region7: #{tpu_custom_call.1} parent=1 // loop_footer_branch
      %19 = sbr.rel target = $region3
    $region8: #{tpu_custom_call.1} parent=1 // loop_exit
      _
    %1092 = vsyncpa [#allocation4], 1
    %s1093 = scalar_lea.sflag [#allocation4], 1
    %1094 = vsyncpa %s1093, 1
    %1095 = vsyncpa [#allocation7], 1
    %1096 = vsyncpa [#allocation5], 1
    %s1097 = scalar_lea.sflag [#allocation5], 1
    %1098 = vsyncpa %s1097, 1
    %1099 = vsyncpa [#allocation10], 1
    %s1100 = scalar_lea.sflag [#allocation10], 1
    %1101 = vsyncpa %s1100, 1

</llo_original>
